<compile_context>
chip_gen: v6e
topology: v6e:2x2x1
jax: 0.10.0
libtpu: 0.0.40
codegen_flags: <defaults>
</compile_context>

<pallas_src>
import functools

import numpy as np
import jax
import jax.numpy as jnp
from jax.experimental import pallas as pl
from jax.experimental.pallas import tpu as pltpu


def spectral_conv1d_kernel(x_ref, dft_ref, w_ref, idft_ref, o_ref, *,
                           bblk, cin_p, cout_p, cin_chunk):
    # x_ref:    (bblk*cin_p, N)       batch block, batch folded into rows
    # dft_ref:  (N, 2M)               [cos | sin] truncated forward real DFT
    # w_ref:    (cin_p, cout_p, 2M)   [w_real | w_imag], channel-padded
    # idft_ref: (2M, N)               [idft ; idft] stacked inverse real DFT
    # o_ref:    (bblk*cout_p, N)
    two_m = dft_ref.shape[1]

    # Fused forward real DFT, one MXU pass for both components:
    #   z[:, :M] = Re(rfft(x))[:, :M],   z[:, M:] = x @ sin = -Im(rfft(x))[:, :M].
    z = jnp.dot(x_ref[...], dft_ref[...],
                preferred_element_type=jnp.float32)           # (bblk*cin_p, 2M)
    z3 = z.reshape(bblk, cin_p, two_m)                        # cin_p % 8 == 0 -> aligned

    # Per-mode complex channel mixing, real part only (sign of Im folded into x@sin):
    #   s[b,o,m]   = sum_i Re(X)[b,i,m] * wr[i,o,m]        (first M lanes)
    #   s[b,o,M+m] = sum_i (x@sin)[b,i,m] * wi[i,o,m]      (last  M lanes)
    # Vectorized over the batch block; Cin accumulated in sublane-aligned chunks.
    s = jnp.zeros((bblk, cout_p, two_m), dtype=jnp.float32)
    for c0 in range(0, cin_p, cin_chunk):
        c1 = min(c0 + cin_chunk, cin_p)
        zc = z3[:, c0:c1, None, :]                            # (bblk, chunk, 1, 2M)
        wc = w_ref[c0:c1, :, :]                               # (chunk, cout_p, 2M)
        s = s + (zc * wc[None, :, :, :]).sum(axis=1)          # (bblk, cout_p, 2M)
    s2 = s.reshape(bblk * cout_p, two_m)                      # cout_p % 8 == 0 -> aligned

    # Inverse real DFT of the truncated, purely-real spectrum.  The stacked idft rows
    # sum the cos-path and sin-path halves, giving Re(S) @ idft in a single matmul.
    y = jnp.dot(s2, idft_ref[...], preferred_element_type=jnp.float32)  # (bblk*cout_p, N)
    o_ref[...] = y.astype(o_ref.dtype)


def _round_up(x, m):
    return ((x + m - 1) // m) * m


def _vmem_limit_bytes():
    cap = 64 * 1024 * 1024                     # conservative fallback (v7x per-core VMEM)
    try:
        cap = int(pltpu.get_tpu_info().vmem_capacity_bytes)
    except Exception:
        pass
    # ~25% headroom for compiler-internal scratch and pipeline buffers.
    return int(min((cap * 3) // 4, 112 * 1024 * 1024))


def _pick_batch_block(B, cin_p, cout_p, N, two_m, vmem_budget, row_target=256):
    """Batch block size: aim for `row_target` MXU rows, balanced grid, VMEM-capped."""
    def vmem_bytes(bblk):
        x_blk = bblk * cin_p * N * 4 * 2                    # double-buffered input block
        o_blk = bblk * cout_p * N * 4 * 2                   # double-buffered output block
        consts = (N * two_m + two_m * N + cin_p * cout_p * two_m) * 4 * 2
        temps = (bblk * cin_p * two_m + 2 * bblk * cout_p * two_m
                 + bblk * cout_p * N) * 4
        return x_blk + o_blk + consts + temps

    bblk = max(1, row_target // max(cin_p, cout_p))
    bblk = min(bblk, B)
    # Re-balance so padded grid steps are even (minimal batch padding).
    n_blocks = -(-B // bblk)
    bblk = -(-B // n_blocks)
    while bblk > 1 and vmem_bytes(bblk) > vmem_budget:
        bblk -= 1
    return bblk


def spectral_conv1d(x, w_real, w_imag, *, block_b=None):
    B, Cin, N = x.shape
    cin_w, Cout, M = w_real.shape
    assert cin_w == Cin and w_imag.shape == w_real.shape
    K = N // 2 + 1
    assert M <= K
    two_m = 2 * M

    cin_p = _round_up(Cin, 8)
    cout_p = _round_up(Cout, 8)

    vmem_limit = _vmem_limit_bytes()
    if block_b is None:
        bblk = _pick_batch_block(B, cin_p, cout_p, N, two_m,
                                 vmem_budget=(vmem_limit * 4) // 5)
    else:
        bblk = block_b
    n_blocks = -(-B // bblk)
    b_pad = n_blocks * bblk

    # ---- constants: truncated real-DFT matrices, f64 build -> f32 ----------------------
    n_idx = np.arange(N, dtype=np.float64)[:, None]
    m_idx = np.arange(M, dtype=np.float64)[None, :]
    ang = 2.0 * np.pi * n_idx * m_idx / N                                   # (N, M)
    # Fused forward DFT: z = x @ [cos | sin]; note x@sin = -Im(rfft(x)).
    dft_cat = jnp.asarray(np.concatenate([np.cos(ang), np.sin(ang)], axis=1),
                          dtype=jnp.float32)                                # (N, 2M)
    # Inverse real-DFT of a purely-real spectrum:
    #   y[n] = (1/N) * sum_k c_k * S[k] * cos(2*pi*k*n/N), c_0 = 1, c_Nyq = 1 (N even).
    coef = np.full((M,), 2.0, dtype=np.float64)
    coef[0] = 1.0
    if N % 2 == 0 and M == K:
        coef[-1] = 1.0
    idft = (coef[:, None] * np.cos(ang.T)) / N                              # (M, N)
    # Stacked twice so the cos-path (z[:,:M]*wr) and sin-path (z[:,M:]*wi) halves of the
    # mixed spectrum are summed by the single IDFT contraction.
    idft2 = jnp.asarray(np.concatenate([idft, idft], axis=0), dtype=jnp.float32)  # (2M, N)

    # ---- operands: pad channels to sublane multiples, batch to the block size ----------
    w_cat = jnp.concatenate([w_real, w_imag], axis=-1).astype(jnp.float32)  # (Cin,Cout,2M)
    if (cin_p, cout_p) != (Cin, Cout):
        w_cat = jnp.pad(w_cat, ((0, cin_p - Cin), (0, cout_p - Cout), (0, 0)))
    xp = x.astype(jnp.float32)
    if (b_pad, cin_p) != (B, Cin):
        xp = jnp.pad(xp, ((0, b_pad - B), (0, cin_p - Cin), (0, 0)))
    x2d = xp.reshape(b_pad * cin_p, N)

    grid = (b_pad // bblk,)
    cin_chunk = min(cin_p, 8)

    flops = (2 * (b_pad * cin_p) * N * two_m            # fused forward DFT
             + 2 * b_pad * cin_p * cout_p * two_m       # spectral mixing
             + 2 * (b_pad * cout_p) * two_m * N)        # stacked inverse DFT
    bytes_accessed = 4 * (b_pad * cin_p * N + N * two_m + cin_p * cout_p * two_m
                          + two_m * N + b_pad * cout_p * N)

    out2d = pl.pallas_call(
        functools.partial(spectral_conv1d_kernel, bblk=bblk, cin_p=cin_p,
                          cout_p=cout_p, cin_chunk=cin_chunk),
        out_shape=jax.ShapeDtypeStruct((b_pad * cout_p, N), jnp.float32),
        grid_spec=pltpu.PrefetchScalarGridSpec(
            num_scalar_prefetch=0,
            grid=grid,
            in_specs=[
                pl.BlockSpec((bblk * cin_p, N), lambda b: (b, 0)),            # x block
                pl.BlockSpec((N, two_m), lambda b: (0, 0)),                   # [cos|sin]
                pl.BlockSpec((cin_p, cout_p, two_m), lambda b: (0, 0, 0)),    # [wr|wi]
                pl.BlockSpec((two_m, N), lambda b: (0, 0)),                   # stacked idft
            ],
            out_specs=pl.BlockSpec((bblk * cout_p, N), lambda b: (b, 0)),
        ),
        compiler_params=pltpu.CompilerParams(
            dimension_semantics=("parallel",),
            vmem_limit_bytes=int(vmem_limit),
        ),
        cost_estimate=pl.CostEstimate(
            flops=int(flops), transcendentals=0, bytes_accessed=int(bytes_accessed)),
    )(x2d, dft_cat, w_cat, idft2)

    return out2d.reshape(b_pad, cout_p, N)[:B, :Cout, :]


def reference_spectral_conv1d(x, w_real, w_imag):
    """Pure-JAX reference mirroring the PyTorch forward."""
    B, Cin, N = x.shape
    _, Cout, M = w_real.shape
    K = N // 2 + 1
    x_ft = jnp.fft.rfft(x)                                        # (B, Cin, K) complex
    w = w_real + 1j * w_imag
    s = jnp.einsum('bik,iok->bok', x_ft[:, :, :M], w)             # complex
    out_ft = jnp.zeros((B, Cout, K), dtype=jnp.float32)
    out_ft = out_ft.at[:, :, :M].set(jnp.real(s).astype(jnp.float32))  # imag discarded
    return jnp.fft.irfft(out_ft, n=N).astype(jnp.float32)


if __name__ == "__main__":
    B, Cin, Cout, N, modes1 = 2, 4, 8, 64, 16

    key = jax.random.PRNGKey(0)
    kx, kwr, kwi = jax.random.split(key, 3)

    x = jax.random.normal(kx, (B, Cin, N), dtype=jnp.float32)

    # weights1 = scale * rand(Cin, Cout, modes1, cfloat): uniform [0,1) real & imag parts.
    scale = 1.0 / (Cin * Cout)
    w_real = scale * jax.random.uniform(kwr, (Cin, Cout, modes1), dtype=jnp.float32)
    w_imag = scale * jax.random.uniform(kwi, (Cin, Cout, modes1), dtype=jnp.float32)

    y = spectral_conv1d(x, w_real, w_imag)
    y = jax.block_until_ready(y)

    y_ref = reference_spectral_conv1d(x, w_real, w_imag)
    np.testing.assert_allclose(np.asarray(y), np.asarray(y_ref), atol=2e-4, rtol=2e-3)

    print("KERNEL_OK")
</pallas_src>

<mosaic_0001>
module attributes {stable_mosaic.version = 11 : i64} {
  func.func @spectral_conv1d_kernel(%arg0: i32, %arg1: memref<16x64xf32, #tpu.memory_space<vmem>>, %arg2: memref<64x32xf32, #tpu.memory_space<vmem>>, %arg3: memref<8x8x32xf32, #tpu.memory_space<vmem>>, %arg4: memref<32x64xf32, #tpu.memory_space<vmem>>, %arg5: memref<16x64xf32, #tpu.memory_space<vmem>>) attributes {dimension_semantics = [#tpu.dimension_semantics<parallel>], iteration_bounds = array<i64: 1>, scalar_prefetch = 0 : i64, scratch_operands = 0 : i64, tpu.core_type = #tpu.core_type<tc>, window_params = [{transform_indices = @transform_0, window_bounds = array<i64: 16, 64>}, {pipeline_mode = #tpu.pipeline_mode<synchronous>, transform_indices = @transform_1, window_bounds = array<i64: 64, 32>}, {pipeline_mode = #tpu.pipeline_mode<synchronous>, transform_indices = @transform_2, window_bounds = array<i64: 8, 8, 32>}, {pipeline_mode = #tpu.pipeline_mode<synchronous>, transform_indices = @transform_3, window_bounds = array<i64: 32, 64>}, {transform_indices = @transform_4, window_bounds = array<i64: 16, 64>}]} {
    %c0 = arith.constant 0 : index
    %c0_0 = arith.constant 0 : index
    %0 = vector.load %arg1[%c0, %c0_0] : memref<16x64xf32, #tpu.memory_space<vmem>>, vector<16x64xf32>
    %c0_1 = arith.constant 0 : index
    %c0_2 = arith.constant 0 : index
    %1 = vector.load %arg2[%c0_1, %c0_2] : memref<64x32xf32, #tpu.memory_space<vmem>>, vector<64x32xf32>
    %cst = arith.constant dense<0.000000e+00> : vector<16x32xf32>
    %2 = tpu.matmul %0, %1, %cst {dimension_numbers = #tpu.dot_dimension_numbers<[1], [0], [0], [1], [0, 0, 1, 1], [], []>} : vector<16x64xf32>, vector<64x32xf32>, vector<16x32xf32> -> vector<16x32xf32>
    %3 = vector.shape_cast %2 : vector<16x32xf32> to vector<2x8x32xf32>
    %cst_3 = arith.constant 0.000000e+00 : f32
    %4 = vector.broadcast %cst_3 : f32 to vector<2x8x32xf32>
    %5 = vector.shape_cast %3 : vector<2x8x32xf32> to vector<2x8x1x32xf32>
    %c0_4 = arith.constant 0 : index
    %c0_5 = arith.constant 0 : index
    %c0_6 = arith.constant 0 : index
    %6 = vector.load %arg3[%c0_4, %c0_5, %c0_6] : memref<8x8x32xf32, #tpu.memory_space<vmem>>, vector<8x8x32xf32>
    %7 = vector.shape_cast %6 : vector<8x8x32xf32> to vector<1x8x8x32xf32>
    %8 = vector.broadcast %5 : vector<2x8x1x32xf32> to vector<2x8x8x32xf32>
    %9 = vector.broadcast %7 : vector<1x8x8x32xf32> to vector<2x8x8x32xf32>
    %10 = arith.mulf %8, %9 : vector<2x8x8x32xf32>
    %cst_7 = arith.constant dense<0.000000e+00> : vector<2x8x32xf32>
    %11 = vector.multi_reduction <add>, %10, %cst_7 [1] : vector<2x8x8x32xf32> to vector<2x8x32xf32>
    %12 = arith.addf %4, %11 : vector<2x8x32xf32>
    %13 = vector.shape_cast %12 : vector<2x8x32xf32> to vector<16x32xf32>
    %c0_8 = arith.constant 0 : index
    %c0_9 = arith.constant 0 : index
    %14 = vector.load %arg4[%c0_8, %c0_9] : memref<32x64xf32, #tpu.memory_space<vmem>>, vector<32x64xf32>
    %cst_10 = arith.constant dense<0.000000e+00> : vector<16x64xf32>
    %15 = tpu.matmul %13, %14, %cst_10 {dimension_numbers = #tpu.dot_dimension_numbers<[1], [0], [0], [1], [0, 0, 1, 1], [], []>} : vector<16x32xf32>, vector<32x64xf32>, vector<16x64xf32> -> vector<16x64xf32>
    %c0_11 = arith.constant 0 : index
    %c0_12 = arith.constant 0 : index
    %16 = vector.load %arg5[%c0_11, %c0_12] : memref<16x64xf32, #tpu.memory_space<vmem>>, vector<16x64xf32>
    tpu.vector_store %arg5[%c0_11, %c0_12], %15 {strides = array<i32>} : memref<16x64xf32, #tpu.memory_space<vmem>>, vector<16x64xf32>,
    return
  }
  func.func @transform_0(%arg0: i32) -> (i32, i32) {
    %c0_i32 = arith.constant 0 : i32
    %c0_i32_0 = arith.constant 0 : i32
    return %arg0, %c0_i32 : i32, i32
  }
  func.func @transform_1(%arg0: i32) -> (i32, i32) {
    %c0_i32 = arith.constant 0 : i32
    %c0_i32_0 = arith.constant 0 : i32
    %c0_i32_1 = arith.constant 0 : i32
    return %c0_i32, %c0_i32_0 : i32, i32
  }
  func.func @transform_2(%arg0: i32) -> (i32, i32, i32) {
    %c0_i32 = arith.constant 0 : i32
    %c0_i32_0 = arith.constant 0 : i32
    %c0_i32_1 = arith.constant 0 : i32
    %c0_i32_2 = arith.constant 0 : i32
    return %c0_i32, %c0_i32_0, %c0_i32_1 : i32, i32, i32
  }
  func.func @transform_3(%arg0: i32) -> (i32, i32) {
    %c0_i32 = arith.constant 0 : i32
    %c0_i32_0 = arith.constant 0 : i32
    %c0_i32_1 = arith.constant 0 : i32
    return %c0_i32, %c0_i32_0 : i32, i32
  }
  func.func @transform_4(%arg0: i32) -> (i32, i32) {
    %c0_i32 = arith.constant 0 : i32
    %c0_i32_0 = arith.constant 0 : i32
    return %arg0, %c0_i32 : i32, i32
  }
}

</mosaic_0001>

<llo_original>
// kernel: tpu_custom_call.1
$region0: #{tpu_custom_call.1}
  #allocation0 [shape = 'u32[]', space=smem, size = 0x4, offset = 0x4, fixed_abs, tag = 'smem constant byte address 0x4 - core index']
  #allocation1 [shape = 'u32[144,128]{1,0:T(1,128)}', space=vmem, size = 0x12000, scoped, tag = 'internal scratch']
  %s0 = inlined_call_operand.hbm [shape: f32[16,64], index: 0, kind: input, shape index: {}]
  %s1 = inlined_call_operand.vmem [shape: f32[64,32], index: 1, kind: input, shape index: {}]
  %s2 = inlined_call_operand.vmem [shape: f32[8,8,32], index: 2, kind: input, shape index: {}]
  %s3 = inlined_call_operand.vmem [shape: f32[32,64], index: 3, kind: input, shape index: {}]
  %s4 = inlined_call_operand.hbm [shape: f32[16,64], index: 4, kind: output, shape index: {}]
  %s5 = sld [smem:[#allocation0]]
  $region30: #{tpu_custom_call.1} parent=0
    _
  %s7 = ssub.s32 1, %s5
  %s8 = scalar_select 0, %s7, %s5
  $region1: #{tpu_custom_call.1} parent=0
    #allocation2 [shape = 'u8[8192]{0}', space=vmem, size = 0x2000, scoped, tag = 'input window, operand 0, single buffered']
    #allocation3 [shape = 's32[1]{0}', space=sflag, size = 0x4, scoped, tag = 'scoped memory for tpu_custom_call.1']
    #allocation4 [shape = 's32[1]{0}', space=sflag, size = 0x4, scoped, tag = 'scoped memory for tpu_custom_call.1']
    #allocation5 [shape = 'u8[8192]{0}', space=vmem, size = 0x2000, scoped, tag = 'output window, operand 0, single buffered']
    %9 = vsyncpa [#allocation3], 0
    %10 = vsyncpa [#allocation4], 0
    // Predicated region
    $region2: #{tpu_custom_call.1} parent=1 // pred_check
      _
    $region3: #{tpu_custom_call.1} parent=1 // pred_check_branch
      %12 = sbr.rel (0) target = $region5
    $region4: #{tpu_custom_call.1} parent=1 // pred_region
      %s14 = ssub.s32 256, 256
      %15 = vsyncadd [#allocation3], %s14
      %s16 = sshll.u32 [#allocation2], 4
      %s17 = int_to_ptr.vmem [resolvable:$true] %s16
      %22 = dma.hbm_to_vmem [thread:$0]  %s0, 256, %s17, [#allocation3], 128, 128, 8
    $region5: #{tpu_custom_call.1} parent=1 // pred_fallthru
      _
    // Predicated region
    $region6: #{tpu_custom_call.1} parent=1 // pred_check
      _
    $region7: #{tpu_custom_call.1} parent=1 // pred_check_branch
      %24 = sbr.rel (0) target = $region9
    $region8: #{tpu_custom_call.1} parent=1 // pred_region
      _
    $region9: #{tpu_custom_call.1} parent=1 // pred_fallthru
      _
    // Predicated region
    $region10: #{tpu_custom_call.1} parent=1 // pred_check
      _
    $region11: #{tpu_custom_call.1} parent=1 // pred_check_branch
      %26 = sbr.rel (0) target = $region13
    $region12: #{tpu_custom_call.1} parent=1 // pred_region
      _
    $region13: #{tpu_custom_call.1} parent=1 // pred_fallthru
      _
    // Predicated region
    $region14: #{tpu_custom_call.1} parent=1 // pred_check
      _
    $region15: #{tpu_custom_call.1} parent=1 // pred_check_branch
      %28 = sbr.rel (0) target = $region17
    $region16: #{tpu_custom_call.1} parent=1 // pred_region
      _
    $region17: #{tpu_custom_call.1} parent=1 // pred_fallthru
      _
    // Predicated region
    $region18: #{tpu_custom_call.1} parent=1 // pred_check
      _
    $region19: #{tpu_custom_call.1} parent=1 // pred_check_branch
      %30 = sbr.rel (0) target = $region21
    $region20: #{tpu_custom_call.1} parent=1 // pred_region
      %31 = dma.done [#allocation3], 256
    $region21: #{tpu_custom_call.1} parent=1 // pred_fallthru
      _
    %v32 = vld [vmem:[#allocation2] sm:$0xff]
    %v33 = vld [vmem:[#allocation2 + $0x8] sm:$0xff]
    %v34 = vld [vmem:[%s1] sm:$0xff]
    %v35 = vld [vmem:[%s1 + $0x8] sm:$0xff]
    %v36 = vld [vmem:[%s1 + $0x10] sm:$0xff]
    %v37 = vld [vmem:[%s1 + $0x18] sm:$0xff]
    %v38 = vld [vmem:[%s1 + $0x20] sm:$0xff]
    %v39 = vld [vmem:[%s1 + $0x28] sm:$0xff]
    %v40 = vld [vmem:[%s1 + $0x30] sm:$0xff]
    %v41 = vld [vmem:[%s1 + $0x38] sm:$0xff]
    %vm42 = vcmask 523264
    %v44 = vsel %vm42, %v32, 0
    %v47 = vsel %vm42, %v33, 0
    %49 = vmatprep.subr.mxu0 0.0
    %50 = vmatpush1.msra.mxu0 0.0
    %51 = vmatprep.subr.mxu0 0.0
    %52 = vmatpush1.msra.mxu0 0.0
    %53 = vmatprep.subr.mxu0 0.0
    %54 = vmatpush1.msra.mxu0 0.0
    %55 = vmatprep.subr.mxu0 0.0
    %56 = vmatpush1.msra.mxu0 0.0
    %57 = vmatprep.subr.mxu0 0.0
    %58 = vmatpush1.msra.mxu0 0.0
    %59 = vmatprep.subr.mxu0 0.0
    %60 = vmatpush1.msra.mxu0 0.0
    %61 = vmatprep.subr.mxu0 0.0
    %62 = vmatpush1.msra.mxu0 0.0
    %63 = vmatprep.subr.mxu0 0.0
    %64 = vmatpush1.msra.mxu0 0.0
    %65 = vmatprep.subr.mxu0 0.0
    %66 = vmatpush1.msra.mxu0 %v41
    %67 = vmatprep.subr.mxu0 0.0
    %68 = vmatpush1.msra.mxu0 %v40
    %69 = vmatprep.subr.mxu0 0.0
    %70 = vmatpush1.msra.mxu0 %v39
    %71 = vmatprep.subr.mxu0 0.0
    %72 = vmatpush1.msra.mxu0 %v38
    %73 = vmatprep.subr.mxu0 0.0
    %74 = vmatpush1.msra.mxu0 %v37
    %75 = vmatprep.subr.mxu0 0.0
    %76 = vmatpush1.msra.mxu0 %v36
    %77 = vmatprep.subr.mxu0 0.0
    %78 = vmatpush1.msra.mxu0 %v35
    %79 = vmatprep.subr.mxu0 0.0
    %80 = vmatpush1.msra.mxu0 %v34
    %81 = vmatprep.subr.mxu0 0.0
    %82 = vmatpush2.msra.mxu0 0.0
    %83 = vmatprep.subr.mxu0 0.0
    %84 = vmatpush2.msra.mxu0 0.0
    %85 = vmatprep.subr.mxu0 0.0
    %86 = vmatpush2.msra.mxu0 0.0
    %87 = vmatprep.subr.mxu0 0.0
    %88 = vmatpush2.msra.mxu0 0.0
    %89 = vmatprep.subr.mxu0 0.0
    %90 = vmatpush2.msra.mxu0 0.0
    %91 = vmatprep.subr.mxu0 0.0
    %92 = vmatpush2.msra.mxu0 0.0
    %93 = vmatprep.subr.mxu0 0.0
    %94 = vmatpush2.msra.mxu0 0.0
    %95 = vmatprep.subr.mxu0 0.0
    %96 = vmatpush2.msra.mxu0 0.0
    %97 = vmatprep.subr.mxu0 0.0
    %98 = vmatpush2.msra.mxu0 0.0
    %99 = vmatprep.subr.mxu0 0.0
    %100 = vmatpush2.msra.mxu0 0.0
    %101 = vmatprep.subr.mxu0 0.0
    %102 = vmatpush2.msra.mxu0 0.0
    %103 = vmatprep.subr.mxu0 0.0
    %104 = vmatpush2.msra.mxu0 0.0
    %105 = vmatprep.subr.mxu0 0.0
    %106 = vmatpush2.msra.mxu0 0.0
    %107 = vmatprep.subr.mxu0 0.0
    %108 = vmatpush2.msra.mxu0 0.0
    %109 = vmatprep.subr.mxu0 0.0
    %110 = vmatpush2.msra.mxu0 0.0
    %111 = vmatprep.subr.mxu0 0.0
    %112 = vmatpush2.msra.mxu0 0.0
    %113 = vmatprep.mubr.f32.mxu0 0.0
    %114 = vmatmul.mubr.f32.gmra.mxu0 %v44
    %v115 = vpop.f32.mrf.mxu0
    %v116 = vadd.f32 0.0, %v115
    %v117 = vpop.f32.mrf.mxu0
    %118 = vmatprep.mubr.f32.mxu0 0.0
    %119 = vmatmul.mubr.f32.gmra.mxu0 %v47
    %v120 = vpop.f32.mrf.mxu0
    %v121 = vadd.f32 0.0, %v120
    %v122 = vpop.f32.mrf.mxu0
    %123 = vdwg.mxu0
    %v126 = vcombine.high %v116, %v116
    %v128 = vunpack.c.l.s4 1966171168
    %v129 = vunpack.c.0.s8 %v128
    %v130 = vlaneseq
    %v131 = vshrl.u32 %v130, 7
    %v132 = vsub.s32 %v129, %v131
    %v133 = vrot.slane %v116, %v132
    %v135 = vunpack.c.l.s4 1966171168
    %v136 = vunpack.c.0.s8 %v135
    %v137 = vlaneseq
    %v138 = vshrl.u32 %v137, 7
    %v139 = vsub.s32 %v136, %v138
    %v140 = vrot.slane %v126, %v139
    %v141 = vcombine.high %v133, %v133
    %v142 = vcombine.high %v140, %v140
    %v144 = vunpack.c.l.s4 1966171168
    %v145 = vunpack.c.0.s8 %v144
    %v146 = vlaneseq
    %v147 = vshrl.u32 %v146, 7
    %v148 = vsub.s32 %v145, %v147
    %v149 = vrot.slane %v133, %v148
    %v151 = vunpack.c.l.s4 1966171168
    %v152 = vunpack.c.0.s8 %v151
    %v153 = vlaneseq
    %v154 = vshrl.u32 %v153, 7
    %v155 = vsub.s32 %v152, %v154
    %v156 = vrot.slane %v140, %v155
    %v158 = vunpack.c.l.s4 1966171168
    %v159 = vunpack.c.0.s8 %v158
    %v160 = vlaneseq
    %v161 = vshrl.u32 %v160, 7
    %v162 = vsub.s32 %v159, %v161
    %v163 = vrot.slane %v141, %v162
    %v165 = vunpack.c.l.s4 1966171168
    %v166 = vunpack.c.0.s8 %v165
    %v167 = vlaneseq
    %v168 = vshrl.u32 %v167, 7
    %v169 = vsub.s32 %v166, %v168
    %v170 = vrot.slane %v142, %v169
    %v171 = vcombine.high %v149, %v149
    %v172 = vcombine.high %v156, %v156
    %v173 = vcombine.high %v163, %v163
    %v174 = vcombine.high %v170, %v170
    %v175 = vcombine.high %v121, %v121
    %v177 = vunpack.c.l.s4 1966171168
    %v178 = vunpack.c.0.s8 %v177
    %v179 = vlaneseq
    %v180 = vshrl.u32 %v179, 7
    %v181 = vsub.s32 %v178, %v180
    %v182 = vrot.slane %v121, %v181
    %v184 = vunpack.c.l.s4 1966171168
    %v185 = vunpack.c.0.s8 %v184
    %v186 = vlaneseq
    %v187 = vshrl.u32 %v186, 7
    %v188 = vsub.s32 %v185, %v187
    %v189 = vrot.slane %v175, %v188
    %v190 = vcombine.high %v182, %v182
    %v191 = vcombine.high %v189, %v189
    %v193 = vunpack.c.l.s4 1966171168
    %v194 = vunpack.c.0.s8 %v193
    %v195 = vlaneseq
    %v196 = vshrl.u32 %v195, 7
    %v197 = vsub.s32 %v194, %v196
    %v198 = vrot.slane %v182, %v197
    %v200 = vunpack.c.l.s4 1966171168
    %v201 = vunpack.c.0.s8 %v200
    %v202 = vlaneseq
    %v203 = vshrl.u32 %v202, 7
    %v204 = vsub.s32 %v201, %v203
    %v205 = vrot.slane %v189, %v204
    %v207 = vunpack.c.l.s4 1966171168
    %v208 = vunpack.c.0.s8 %v207
    %v209 = vlaneseq
    %v210 = vshrl.u32 %v209, 7
    %v211 = vsub.s32 %v208, %v210
    %v212 = vrot.slane %v190, %v211
    %v214 = vunpack.c.l.s4 1966171168
    %v215 = vunpack.c.0.s8 %v214
    %v216 = vlaneseq
    %v217 = vshrl.u32 %v216, 7
    %v218 = vsub.s32 %v215, %v217
    %v219 = vrot.slane %v191, %v218
    %v220 = vcombine.high %v198, %v198
    %v221 = vcombine.high %v205, %v205
    %v222 = vcombine.high %v212, %v212
    %v223 = vcombine.high %v219, %v219
    %v224 = vld [vmem:[%s2] sm:$0xff]
    %v225 = vld [vmem:[%s2 + $0x8] sm:$0xff]
    %v226 = vld [vmem:[%s2 + $0x10] sm:$0xff]
    %v227 = vld [vmem:[%s2 + $0x18] sm:$0xff]
    %v228 = vld [vmem:[%s2 + $0x20] sm:$0xff]
    %v229 = vld [vmem:[%s2 + $0x28] sm:$0xff]
    %v230 = vld [vmem:[%s2 + $0x30] sm:$0xff]
    %v231 = vld [vmem:[%s2 + $0x38] sm:$0xff]
    %v232 = vlaneseq
    %v233 = vshrl.u32 %v232, 7
    %v234 = vsub.s32 0, %v233
    %v235 = vrot.slane %v149, %v234
    %v236 = vlaneseq
    %v237 = vshrl.u32 %v236, 7
    %v238 = vsub.s32 0, %v237
    %v239 = vrot.slane %v163, %v238
    %v240 = vlaneseq
    %v241 = vshrl.u32 %v240, 7
    %v242 = vsub.s32 0, %v241
    %v243 = vrot.slane %v171, %v242
    %v244 = vlaneseq
    %v245 = vshrl.u32 %v244, 7
    %v246 = vsub.s32 0, %v245
    %v247 = vrot.slane %v173, %v246
    %v248 = vlaneseq
    %v249 = vshrl.u32 %v248, 7
    %v250 = vsub.s32 0, %v249
    %v251 = vrot.slane %v156, %v250
    %v252 = vlaneseq
    %v253 = vshrl.u32 %v252, 7
    %v254 = vsub.s32 0, %v253
    %v255 = vrot.slane %v170, %v254
    %v256 = vlaneseq
    %v257 = vshrl.u32 %v256, 7
    %v258 = vsub.s32 0, %v257
    %v259 = vrot.slane %v172, %v258
    %v260 = vlaneseq
    %v261 = vshrl.u32 %v260, 7
    %v262 = vsub.s32 0, %v261
    %v263 = vrot.slane %v174, %v262
    %v264 = vlaneseq
    %v265 = vshrl.u32 %v264, 7
    %v266 = vsub.s32 0, %v265
    %v267 = vrot.slane %v198, %v266
    %v268 = vlaneseq
    %v269 = vshrl.u32 %v268, 7
    %v270 = vsub.s32 0, %v269
    %v271 = vrot.slane %v212, %v270
    %v272 = vlaneseq
    %v273 = vshrl.u32 %v272, 7
    %v274 = vsub.s32 0, %v273
    %v275 = vrot.slane %v220, %v274
    %v276 = vlaneseq
    %v277 = vshrl.u32 %v276, 7
    %v278 = vsub.s32 0, %v277
    %v279 = vrot.slane %v222, %v278
    %v280 = vlaneseq
    %v281 = vshrl.u32 %v280, 7
    %v282 = vsub.s32 0, %v281
    %v283 = vrot.slane %v205, %v282
    %v284 = vlaneseq
    %v285 = vshrl.u32 %v284, 7
    %v286 = vsub.s32 0, %v285
    %v287 = vrot.slane %v219, %v286
    %v288 = vlaneseq
    %v289 = vshrl.u32 %v288, 7
    %v290 = vsub.s32 0, %v289
    %v291 = vrot.slane %v221, %v290
    %v292 = vlaneseq
    %v293 = vshrl.u32 %v292, 7
    %v294 = vsub.s32 0, %v293
    %v295 = vrot.slane %v223, %v294
    %v312 = vmul.f32 %v235, %v224
    %v313 = vmul.f32 %v239, %v225
    %v314 = vmul.f32 %v243, %v226
    %v315 = vmul.f32 %v247, %v227
    %v316 = vmul.f32 %v251, %v228
    %v317 = vmul.f32 %v255, %v229
    %v318 = vmul.f32 %v259, %v230
    %v319 = vmul.f32 %v263, %v231
    %v320 = vmul.f32 %v267, %v224
    %v321 = vmul.f32 %v271, %v225
    %v322 = vmul.f32 %v275, %v226
    %v323 = vmul.f32 %v279, %v227
    %v324 = vmul.f32 %v283, %v228
    %v325 = vmul.f32 %v287, %v229
    %v326 = vmul.f32 %v291, %v230
    %v327 = vmul.f32 %v295, %v231
    %vm328 = vcmask 261120
    %v329 = vsel %vm328, %v312, 0.0
    %v330 = vsel %vm328, %v313, 0.0
    %v331 = vadd.f32 %v329, %v330
    %v332 = vsel %vm328, %v314, 0.0
    %v333 = vadd.f32 %v331, %v332
    %v334 = vsel %vm328, %v315, 0.0
    %v335 = vadd.f32 %v333, %v334
    %v336 = vsel %vm328, %v316, 0.0
    %v337 = vadd.f32 %v335, %v336
    %v338 = vsel %vm328, %v317, 0.0
    %v339 = vadd.f32 %v337, %v338
    %v340 = vsel %vm328, %v318, 0.0
    %v341 = vadd.f32 %v339, %v340
    %v342 = vsel %vm328, %v319, 0.0
    %v343 = vadd.f32 %v341, %v342
    %v344 = vsel %vm328, %v320, 0.0
    %v345 = vsel %vm328, %v321, 0.0
    %v346 = vadd.f32 %v344, %v345
    %v347 = vsel %vm328, %v322, 0.0
    %v348 = vadd.f32 %v346, %v347
    %v349 = vsel %vm328, %v323, 0.0
    %v350 = vadd.f32 %v348, %v349
    %v351 = vsel %vm328, %v324, 0.0
    %v352 = vadd.f32 %v350, %v351
    %v353 = vsel %vm328, %v325, 0.0
    %v354 = vadd.f32 %v352, %v353
    %v355 = vsel %vm328, %v326, 0.0
    %v356 = vadd.f32 %v354, %v355
    %v357 = vsel %vm328, %v327, 0.0
    %v358 = vadd.f32 %v356, %v357
    %v359 = vadd.f32 %v343, 0.0
    %v360 = vadd.f32 %v358, 0.0
    %v361 = vld [vmem:[%s3] sm:$0xff]
    %v362 = vld [vmem:[%s3 + $0x8] sm:$0xff]
    %v363 = vld [vmem:[%s3 + $0x10] sm:$0xff]
    %v364 = vld [vmem:[%s3 + $0x18] sm:$0xff]
    %v366 = vsel %vm328, %v359, 0
    %v369 = vsel %vm328, %v360, 0
    %371 = vmatprep.subr.mxu0 0.0
    %372 = vmatpush1.msra.mxu0 0.0
    %373 = vmatprep.subr.mxu0 0.0
    %374 = vmatpush1.msra.mxu0 0.0
    %375 = vmatprep.subr.mxu0 0.0
    %376 = vmatpush1.msra.mxu0 0.0
    %377 = vmatprep.subr.mxu0 0.0
    %378 = vmatpush1.msra.mxu0 0.0
    %379 = vmatprep.subr.mxu0 0.0
    %380 = vmatpush1.msra.mxu0 0.0
    %381 = vmatprep.subr.mxu0 0.0
    %382 = vmatpush1.msra.mxu0 0.0
    %383 = vmatprep.subr.mxu0 0.0
    %384 = vmatpush1.msra.mxu0 0.0
    %385 = vmatprep.subr.mxu0 0.0
    %386 = vmatpush1.msra.mxu0 0.0
    %387 = vmatprep.subr.mxu0 0.0
    %388 = vmatpush1.msra.mxu0 0.0
    %389 = vmatprep.subr.mxu0 0.0
    %390 = vmatpush1.msra.mxu0 0.0
    %391 = vmatprep.subr.mxu0 0.0
    %392 = vmatpush1.msra.mxu0 0.0
    %393 = vmatprep.subr.mxu0 0.0
    %394 = vmatpush1.msra.mxu0 0.0
    %395 = vmatprep.subr.mxu0 0.0
    %396 = vmatpush1.msra.mxu0 %v364
    %397 = vmatprep.subr.mxu0 0.0
    %398 = vmatpush1.msra.mxu0 %v363
    %399 = vmatprep.subr.mxu0 0.0
    %400 = vmatpush1.msra.mxu0 %v362
    %401 = vmatprep.subr.mxu0 0.0
    %402 = vmatpush1.msra.mxu0 %v361
    %403 = vmatprep.subr.mxu0 0.0
    %404 = vmatpush2.msra.mxu0 0.0
    %405 = vmatprep.subr.mxu0 0.0
    %406 = vmatpush2.msra.mxu0 0.0
    %407 = vmatprep.subr.mxu0 0.0
    %408 = vmatpush2.msra.mxu0 0.0
    %409 = vmatprep.subr.mxu0 0.0
    %410 = vmatpush2.msra.mxu0 0.0
    %411 = vmatprep.subr.mxu0 0.0
    %412 = vmatpush2.msra.mxu0 0.0
    %413 = vmatprep.subr.mxu0 0.0
    %414 = vmatpush2.msra.mxu0 0.0
    %415 = vmatprep.subr.mxu0 0.0
    %416 = vmatpush2.msra.mxu0 0.0
    %417 = vmatprep.subr.mxu0 0.0
    %418 = vmatpush2.msra.mxu0 0.0
    %419 = vmatprep.subr.mxu0 0.0
    %420 = vmatpush2.msra.mxu0 0.0
    %421 = vmatprep.subr.mxu0 0.0
    %422 = vmatpush2.msra.mxu0 0.0
    %423 = vmatprep.subr.mxu0 0.0
    %424 = vmatpush2.msra.mxu0 0.0
    %425 = vmatprep.subr.mxu0 0.0
    %426 = vmatpush2.msra.mxu0 0.0
    %427 = vmatprep.subr.mxu0 0.0
    %428 = vmatpush2.msra.mxu0 0.0
    %429 = vmatprep.subr.mxu0 0.0
    %430 = vmatpush2.msra.mxu0 0.0
    %431 = vmatprep.subr.mxu0 0.0
    %432 = vmatpush2.msra.mxu0 0.0
    %433 = vmatprep.subr.mxu0 0.0
    %434 = vmatpush2.msra.mxu0 0.0
    %435 = vmatprep.mubr.f32.mxu0 0.0
    %436 = vmatmul.mubr.f32.gmra.mxu0 %v366
    %v437 = vpop.f32.mrf.mxu0
    %v438 = vadd.f32 0.0, %v437
    %v439 = vpop.f32.mrf.mxu0
    %440 = vmatprep.mubr.f32.mxu0 0.0
    %441 = vmatmul.mubr.f32.gmra.mxu0 %v369
    %v442 = vpop.f32.mrf.mxu0
    %v443 = vadd.f32 0.0, %v442
    %v444 = vpop.f32.mrf.mxu0
    %445 = vdwg.mxu0
    %446 = vst.msk [vmem:[#allocation5] sm:$0xff] %vm42, %v438
    %447 = vst.msk [vmem:[#allocation5 + $0x8] sm:$0xff] %vm42, %v443
    // Predicated region
    $region22: #{tpu_custom_call.1} parent=1 // pred_check
      _
    $region23: #{tpu_custom_call.1} parent=1 // pred_check_branch
      %449 = sbr.rel (0) target = $region25
    $region24: #{tpu_custom_call.1} parent=1 // pred_region
      %s451 = ssub.s32 256, 256
      %452 = vsyncadd [#allocation4], %s451
      %s453 = sshll.u32 [#allocation5], 4
      %s454 = int_to_ptr.vmem [resolvable:$true] %s453
      %459 = dma.vmem_to_hbm [thread:$0]  %s454, 256, %s4, [#allocation4], 128, 128, 8
    $region25: #{tpu_custom_call.1} parent=1 // pred_fallthru
      _
    // Predicated region
    $region26: #{tpu_custom_call.1} parent=1 // pred_check
      _
    $region27: #{tpu_custom_call.1} parent=1 // pred_check_branch
      %461 = sbr.rel (0) target = $region29
    $region28: #{tpu_custom_call.1} parent=1 // pred_region
      %462 = dma.done [#allocation4], 256
    $region29: #{tpu_custom_call.1} parent=1 // pred_fallthru
      _
    %463 = vsyncpa [#allocation3], 1
    %464 = vsyncpa [#allocation4], 1

</llo_original>
